<compile_context>
chip_gen: v7x
topology: tpu7x:2x2x1
jax: 0.10.0
libtpu: 0.0.40
codegen_flags: <defaults>
</compile_context>

<pallas_src>
import numpy as np
import jax
import jax.numpy as jnp
from jax.experimental import pallas as pl
from jax.experimental.pallas import tpu as pltpu

LANE = 128  # TPU vreg lane width


def gcn_kernel(adj_ref, w1_ref, b1_ref, w3_ref, b3_ref, out_ref):
    # adj is read once (already bf16 from the wrapper) and reused by both layers.
    adj = adj_ref[...]

    # ---- gcn1: x @ W1 == W1 (x is identity) -> h1 = adj @ W1 + b1 ; ReLU ----
    h1 = jnp.dot(adj, w1_ref[...], preferred_element_type=jnp.float32) + b1_ref[...]
    h1 = jnp.maximum(h1, 0.0)

    # TODO(synk): nn.Dropout(p=0.3) is identity in eval mode; training-mode
    # stochastic masking is not reproduced here.

    # ---- gcn3: out = adj @ (h1 @ W3) + b3 (bf16 MXU inputs, f32 accumulate) ----
    support3 = jnp.dot(h1.astype(jnp.bfloat16), w3_ref[...],
                       preferred_element_type=jnp.float32)
    out_ref[...] = (
        jnp.dot(adj, support3.astype(jnp.bfloat16),
                preferred_element_type=jnp.float32)
        + b3_ref[...]
    )


def gcn_forward(adj_norm, w1, b1, w3, b3):
    V, D = w1.shape
    Dp = ((D + LANE - 1) // LANE) * LANE  # lane-dense feature dim (multiple of 128)

    # Cast once in the wrapper (halves adj/weight DMA bytes, no per-layer VPU
    # cast passes inside the kernel). Zero-padded columns/rows contribute
    # exactly 0 to every dot, so the first D output columns are unchanged.
    adj_bf = adj_norm.astype(jnp.bfloat16)
    w1p = jnp.zeros((V, Dp), jnp.bfloat16).at[:, :D].set(w1.astype(jnp.bfloat16))
    w3p = jnp.zeros((Dp, Dp), jnp.bfloat16).at[:D, :D].set(w3.astype(jnp.bfloat16))
    b1p = jnp.zeros((1, Dp), jnp.float32).at[:, :D].set(b1.reshape(1, -1))
    b3p = jnp.zeros((1, Dp), jnp.float32).at[:, :D].set(b3.reshape(1, -1))

    flops = 2 * V * V * Dp + 2 * V * Dp * Dp + 2 * V * V * Dp
    bytes_accessed = (adj_bf.size * 2 + w1p.size * 2 + w3p.size * 2
                      + b1p.size * 4 + b3p.size * 4 + V * Dp * 4)

    vmem = pl.BlockSpec(memory_space=pltpu.MemorySpace.VMEM)
    out_padded = pl.pallas_call(
        gcn_kernel,
        out_shape=jax.ShapeDtypeStruct((V, Dp), jnp.float32),
        in_specs=[vmem] * 5,
        out_specs=vmem,
        cost_estimate=pl.CostEstimate(
            flops=flops, transcendentals=0, bytes_accessed=bytes_accessed),
    )(adj_bf, w1p, b1p, w3p, b3p)
    return out_padded[:, :D]


def normalize(mx):
    """Row-normalize matrix (mirrors GCN.normalize in the PyTorch module)."""
    rowsum = np.array(mx.sum(1))
    with np.errstate(divide="ignore"):
        r_inv = np.power(rowsum, -1.0).flatten()
    r_inv[np.isinf(r_inv)] = 0.0
    r_mat_inv = np.diagflat(r_inv)
    return r_mat_inv.dot(mx)


if __name__ == "__main__":
    voc_size, emb_dim = 16, 32

    key = jax.random.PRNGKey(0)
    k_adj, k_w1, k_b1, k_w3, k_b3 = jax.random.split(key, 5)

    # Deterministic synthetic DDI adjacency (0/1, symmetric), then normalize(adj + I).
    adj_raw = (jax.random.uniform(k_adj, (voc_size, voc_size)) > 0.7).astype(jnp.float32)
    adj_np = np.array(adj_raw)
    adj_np = np.maximum(adj_np, adj_np.T)
    np.fill_diagonal(adj_np, 0.0)
    adj_norm = normalize(adj_np + np.eye(voc_size)).astype(np.float32)

    # GraphConvolution-style init: uniform(-1/sqrt(out_features), +1/sqrt(out_features)).
    stdv = 1.0 / np.sqrt(emb_dim)
    w1 = jax.random.uniform(k_w1, (voc_size, emb_dim), jnp.float32, -stdv, stdv)
    b1 = jax.random.uniform(k_b1, (emb_dim,), jnp.float32, -stdv, stdv)
    w3 = jax.random.uniform(k_w3, (emb_dim, emb_dim), jnp.float32, -stdv, stdv)
    b3 = jax.random.uniform(k_b3, (emb_dim,), jnp.float32, -stdv, stdv)

    adj_j = jnp.asarray(adj_norm)

    out = gcn_forward(adj_j, w1, b1, w3, b3)
    jax.block_until_ready(out)
    assert out.shape == (voc_size, emb_dim)

    # Matched-precision JAX reference (same bf16-input / f32-accumulate path).
    adj_bf = adj_j.astype(jnp.bfloat16)
    w1_bf = w1.astype(jnp.bfloat16)
    w3_bf = w3.astype(jnp.bfloat16)
    h_ref = jnp.maximum(
        jnp.dot(adj_bf, w1_bf, preferred_element_type=jnp.float32) + b1, 0.0)
    s_ref = jnp.dot(h_ref.astype(jnp.bfloat16), w3_bf,
                    preferred_element_type=jnp.float32)
    ref = jnp.dot(adj_bf, s_ref.astype(jnp.bfloat16),
                  preferred_element_type=jnp.float32) + b3
    assert jnp.allclose(out, ref, atol=1e-4, rtol=1e-4), "kernel/reference mismatch"

    # Sanity check against the pure-f32 forward (bf16 rounding tolerance).
    h_f32 = jnp.maximum(adj_j @ w1 + b1, 0.0)
    ref_f32 = adj_j @ (h_f32 @ w3) + b3
    assert jnp.allclose(out, ref_f32, atol=5e-2, rtol=5e-2), "f32 sanity mismatch"

    print("KERNEL_OK")
</pallas_src>

<mosaic_0001>
module attributes {stable_mosaic.version = 11 : i64} {
  func.func @gcn_kernel(%arg0: memref<16x16xbf16, #tpu.memory_space<vmem>>, %arg1: memref<16x128xbf16, #tpu.memory_space<vmem>>, %arg2: memref<1x128xf32, #tpu.memory_space<vmem>>, %arg3: memref<128x128xbf16, #tpu.memory_space<vmem>>, %arg4: memref<1x128xf32, #tpu.memory_space<vmem>>, %arg5: memref<16x128xf32, #tpu.memory_space<vmem>>) attributes {dimension_semantics = [], scalar_prefetch = 0 : i64, scratch_operands = 0 : i64, tpu.core_type = #tpu.core_type<tc>} {
    %c0 = arith.constant 0 : index
    %c0_0 = arith.constant 0 : index
    %0 = vector.load %arg0[%c0, %c0_0] : memref<16x16xbf16, #tpu.memory_space<vmem>>, vector<16x16xbf16>
    %c0_1 = arith.constant 0 : index
    %c0_2 = arith.constant 0 : index
    %1 = vector.load %arg1[%c0_1, %c0_2] : memref<16x128xbf16, #tpu.memory_space<vmem>>, vector<16x128xbf16>
    %cst = arith.constant dense<0.000000e+00> : vector<16x128xf32>
    %2 = tpu.matmul %0, %1, %cst {dimension_numbers = #tpu.dot_dimension_numbers<[1], [0], [0], [1], [0, 0, 1, 1], [], []>} : vector<16x16xbf16>, vector<16x128xbf16>, vector<16x128xf32> -> vector<16x128xf32>
    %c0_3 = arith.constant 0 : index
    %c0_4 = arith.constant 0 : index
    %3 = vector.load %arg2[%c0_3, %c0_4] : memref<1x128xf32, #tpu.memory_space<vmem>>, vector<1x128xf32>
    %4 = vector.broadcast %3 : vector<1x128xf32> to vector<16x128xf32>
    %5 = arith.addf %2, %4 : vector<16x128xf32>
    %cst_5 = arith.constant 0.000000e+00 : f32
    %6 = vector.broadcast %cst_5 : f32 to vector<16x128xf32>
    %7 = arith.maximumf %5, %6 : vector<16x128xf32>
    %8 = arith.truncf %7 : vector<16x128xf32> to vector<16x128xbf16>
    %c0_6 = arith.constant 0 : index
    %c0_7 = arith.constant 0 : index
    %9 = vector.load %arg3[%c0_6, %c0_7] : memref<128x128xbf16, #tpu.memory_space<vmem>>, vector<128x128xbf16>
    %cst_8 = arith.constant dense<0.000000e+00> : vector<16x128xf32>
    %10 = tpu.matmul %8, %9, %cst_8 {dimension_numbers = #tpu.dot_dimension_numbers<[1], [0], [0], [1], [0, 0, 1, 1], [], []>} : vector<16x128xbf16>, vector<128x128xbf16>, vector<16x128xf32> -> vector<16x128xf32>
    %11 = arith.truncf %10 : vector<16x128xf32> to vector<16x128xbf16>
    %cst_9 = arith.constant dense<0.000000e+00> : vector<16x128xf32>
    %12 = tpu.matmul %0, %11, %cst_9 {dimension_numbers = #tpu.dot_dimension_numbers<[1], [0], [0], [1], [0, 0, 1, 1], [], []>} : vector<16x16xbf16>, vector<16x128xbf16>, vector<16x128xf32> -> vector<16x128xf32>
    %c0_10 = arith.constant 0 : index
    %c0_11 = arith.constant 0 : index
    %13 = vector.load %arg4[%c0_10, %c0_11] : memref<1x128xf32, #tpu.memory_space<vmem>>, vector<1x128xf32>
    %14 = vector.broadcast %13 : vector<1x128xf32> to vector<16x128xf32>
    %15 = arith.addf %12, %14 : vector<16x128xf32>
    %c0_12 = arith.constant 0 : index
    %c0_13 = arith.constant 0 : index
    %16 = vector.load %arg5[%c0_12, %c0_13] : memref<16x128xf32, #tpu.memory_space<vmem>>, vector<16x128xf32>
    tpu.vector_store %arg5[%c0_12, %c0_13], %15 {strides = array<i32>} : memref<16x128xf32, #tpu.memory_space<vmem>>, vector<16x128xf32>,
    return
  }
}

</mosaic_0001>

<llo_original>
// kernel: tpu_custom_call.1
$region0: #{tpu_custom_call.1}
  #allocation0 [shape = 'u32[]', space=smem, size = 0x4, offset = 0x4, fixed_abs, tag = 'smem constant byte address 0x4 - core index']
  #allocation1 [shape = 'u32[144,128]{1,0:T(1,128)}', space=vmem, size = 0x12000, scoped, tag = 'internal scratch']
  %s0 = inlined_call_operand.hbm [shape: bf16[16,16], index: 0, kind: input, shape index: {}]
  %s1 = inlined_call_operand.hbm [shape: bf16[16,128], index: 1, kind: input, shape index: {}]
  %s2 = inlined_call_operand.vmem [shape: f32[1,128], index: 2, kind: input, shape index: {}]
  %s3 = inlined_call_operand.hbm [shape: bf16[128,128], index: 3, kind: input, shape index: {}]
  %s4 = inlined_call_operand.vmem [shape: f32[1,128], index: 4, kind: input, shape index: {}]
  %s5 = inlined_call_operand.hbm [shape: f32[16,128], index: 5, kind: output, shape index: {}]
  %s6 = sld [smem:[#allocation0]]
  $region42: #{tpu_custom_call.1} parent=0
    _
  %s8 = ssub.s32 1, %s6
  %s9 = scalar_select 0, %s8, %s6
  $region1: #{tpu_custom_call.1} parent=0
    #allocation2 [shape = 'u8[4096]{0}', space=vmem, size = 0x1000, scoped, tag = 'input window, operand 0, single buffered']
    #allocation3 [shape = 's32[1]{0}', space=sflag, size = 0x4, scoped, tag = 'scoped memory for tpu_custom_call.1']
    #allocation4 [shape = 's32[1]{0}', space=sflag, size = 0x4, scoped, tag = 'scoped memory for tpu_custom_call.1']
    #allocation5 [shape = 'u8[4096]{0}', space=vmem, size = 0x1000, scoped, tag = 'input window, operand 1, single buffered']
    #allocation6 [shape = 's32[1]{0}', space=sflag, size = 0x4, scoped, tag = 'scoped memory for tpu_custom_call.1']
    #allocation7 [shape = 'u8[32768]{0}', space=vmem, size = 0x8000, scoped, tag = 'input window, operand 3, single buffered']
    #allocation8 [shape = 'u8[8192]{0}', space=vmem, size = 0x2000, scoped, tag = 'output window, operand 0, single buffered']
    %10 = vsyncpa [#allocation3], 0
    %11 = vsyncpa [#allocation6], 0
    %12 = vsyncpa [#allocation4], 0
    // Predicated region
    $region2: #{tpu_custom_call.1} parent=1 // pred_check
      _
    $region3: #{tpu_custom_call.1} parent=1 // pred_check_branch
      %14 = sbr.rel (0) target = $region5
    $region4: #{tpu_custom_call.1} parent=1 // pred_region
      %s16 = ssub.s32 128, 128
      %17 = vsyncadd [#allocation3], %s16
      %s18 = sshll.u32 [#allocation2], 4
      %s19 = int_to_ptr.vmem [resolvable:$true] %s18
      %24 = dma.hbm_to_vmem [thread:$0]  %s0, 128, %s19, [#allocation3], 64, 64, 4
    $region5: #{tpu_custom_call.1} parent=1 // pred_fallthru
      _
    // Predicated region
    $region6: #{tpu_custom_call.1} parent=1 // pred_check
      _
    $region7: #{tpu_custom_call.1} parent=1 // pred_check_branch
      %26 = sbr.rel (0) target = $region9
    $region8: #{tpu_custom_call.1} parent=1 // pred_region
      %s28 = ssub.s32 128, 128
      %29 = vsyncadd [#allocation6], %s28
      %s30 = sshll.u32 [#allocation5], 4
      %s31 = int_to_ptr.vmem [resolvable:$true] %s30
      %36 = dma.hbm_to_vmem [thread:$0]  %s1, 128, %s31, [#allocation6], 64, 64, 4
    $region9: #{tpu_custom_call.1} parent=1 // pred_fallthru
      _
    // Predicated region
    $region10: #{tpu_custom_call.1} parent=1 // pred_check
      _
    $region11: #{tpu_custom_call.1} parent=1 // pred_check_branch
      %38 = sbr.rel (0) target = $region13
    $region12: #{tpu_custom_call.1} parent=1 // pred_region
      _
    $region13: #{tpu_custom_call.1} parent=1 // pred_fallthru
      _
    // Predicated region
    $region14: #{tpu_custom_call.1} parent=1 // pred_check
      _
    $region15: #{tpu_custom_call.1} parent=1 // pred_check_branch
      %40 = sbr.rel (0) target = $region17
    $region16: #{tpu_custom_call.1} parent=1 // pred_region
      %s42 = ssub.s32 1024, 1024
      %43 = vsyncadd [#allocation6], %s42
      %s44 = sshll.u32 [#allocation7], 4
      %s45 = int_to_ptr.vmem [resolvable:$true] %s44
      %50 = dma.hbm_to_vmem [thread:$0]  %s3, 1024, %s45, [#allocation6], 64, 64, 4
    $region17: #{tpu_custom_call.1} parent=1 // pred_fallthru
      _
    // Predicated region
    $region18: #{tpu_custom_call.1} parent=1 // pred_check
      _
    $region19: #{tpu_custom_call.1} parent=1 // pred_check_branch
      %52 = sbr.rel (0) target = $region21
    $region20: #{tpu_custom_call.1} parent=1 // pred_region
      _
    $region21: #{tpu_custom_call.1} parent=1 // pred_fallthru
      _
    // Predicated region
    $region22: #{tpu_custom_call.1} parent=1 // pred_check
      _
    $region23: #{tpu_custom_call.1} parent=1 // pred_check_branch
      %54 = sbr.rel (0) target = $region25
    $region24: #{tpu_custom_call.1} parent=1 // pred_region
      %55 = dma.done [#allocation3], 128
    $region25: #{tpu_custom_call.1} parent=1 // pred_fallthru
      _
    // Predicated region
    $region26: #{tpu_custom_call.1} parent=1 // pred_check
      _
    $region27: #{tpu_custom_call.1} parent=1 // pred_check_branch
      %57 = sbr.rel (0) target = $region29
    $region28: #{tpu_custom_call.1} parent=1 // pred_region
      %58 = dma.done [#allocation6], 128
    $region29: #{tpu_custom_call.1} parent=1 // pred_fallthru
      _
    // Predicated region
    $region30: #{tpu_custom_call.1} parent=1 // pred_check
      _
    $region31: #{tpu_custom_call.1} parent=1 // pred_check_branch
      %60 = sbr.rel (0) target = $region33
    $region32: #{tpu_custom_call.1} parent=1 // pred_region
      %61 = dma.done [#allocation6], 1024
    $region33: #{tpu_custom_call.1} parent=1 // pred_fallthru
      _
    %v63 = vld [vmem:[#allocation2] sm:$0xf]
    %v64 = vld [vmem:[#allocation2 + $0x4] sm:$0xf]
    %v65 = vld [vmem:[#allocation5] sm:$0xf]
    %v66 = vld [vmem:[#allocation5 + $0x4] sm:$0xf]
    %v67 = vld [vmem:[%s2] sm:$0x1]
    %v69 = vlaneseq
    %v70 = vshrl.u32 %v69, 7
    %v71 = vsub.s32 0, %v70
    %v72 = vrot.slane %v67, %v71
    %v76 = vunpack.c.l.b16 %v63
    %v77 = vunpack.c.l.b16 %v64
    %v78 = vpack.c.b16 %v77, %v76
    %v81 = vunpack.c.l.b16 %v65
    %v82 = vunpack.c.l.b16 %v66
    %v83 = vpack.c.b16 %v82, %v81
    %vm85 = vcmask 130048
    %v87 = vsel %vm85, %v78, 0
    %89 = vmatprep.subr.bf16.mxu0 0
    %90 = vmatpush1.bf16.msra.mxu0 %v83
    %91 = vmatprep.subr.bf16.mxu0 0
    %92 = vmatpush1.bf16.msra.mxu0 0
    %93 = vmatprep.subr.bf16.mxu0 0
    %94 = vmatpush1.bf16.msra.mxu0 0
    %95 = vmatprep.subr.bf16.mxu0 0
    %96 = vmatpush1.bf16.msra.mxu0 0
    %97 = vmatprep.subr.bf16.mxu0 0
    %98 = vmatpush1.bf16.msra.mxu0 0
    %99 = vmatprep.subr.bf16.mxu0 0
    %100 = vmatpush1.bf16.msra.mxu0 0
    %101 = vmatprep.subr.bf16.mxu0 0
    %102 = vmatpush1.bf16.msra.mxu0 0
    %103 = vmatprep.subr.bf16.mxu0 0
    %104 = vmatpush1.bf16.msra.mxu0 0
    %105 = vmatprep.subr.bf16.mxu0 0
    %106 = vmatpush1.bf16.msra.mxu0 0
    %107 = vmatprep.subr.bf16.mxu0 0
    %108 = vmatpush1.bf16.msra.mxu0 0
    %109 = vmatprep.subr.bf16.mxu0 0
    %110 = vmatpush1.bf16.msra.mxu0 0
    %111 = vmatprep.subr.bf16.mxu0 0
    %112 = vmatpush1.bf16.msra.mxu0 0
    %113 = vmatprep.subr.bf16.mxu0 0
    %114 = vmatpush1.bf16.msra.mxu0 0
    %115 = vmatprep.subr.bf16.mxu0 0
    %116 = vmatpush1.bf16.msra.mxu0 0
    %117 = vmatprep.subr.bf16.mxu0 0
    %118 = vmatpush1.bf16.msra.mxu0 0
    %119 = vmatprep.subr.bf16.mxu0 0
    %120 = vmatpush1.bf16.msra.mxu0 0
    %121 = vmatprep.mubr.bf16.mxu0 0
    %122 = vmatmul.mubr.bf16.gmra.mrb[0].mxu0 %v87
    %v123 = vpop.f32.mrb[0].mxu0
    %v124 = vadd.f32 %v72, %v123
    %v125 = vpop.f32.mrb[0].mxu0
    %v126 = vpop.f32.mrb[0].mxu0
    %v127 = vadd.f32 %v72, %v126
    %v128 = vpop.f32.mrb[0].mxu0
    %129 = vdwg.mxu0
    %v130 = vmax.f32 %v124, 0.0
    %v131 = vmax.f32 %v127, 0.0
    %v132 = vpack.c.bf16 %v131, %v130
    %v133 = vld [vmem:[#allocation7] sm:$0xf]
    %v134 = vld [vmem:[#allocation7 + $0x4] sm:$0xf]
    %v135 = vld [vmem:[#allocation7 + $0x8] sm:$0xf]
    %v136 = vld [vmem:[#allocation7 + $0xc] sm:$0xf]
    %v137 = vld [vmem:[#allocation7 + $0x10] sm:$0xf]
    %v138 = vld [vmem:[#allocation7 + $0x14] sm:$0xf]
    %v139 = vld [vmem:[#allocation7 + $0x18] sm:$0xf]
    %v140 = vld [vmem:[#allocation7 + $0x1c] sm:$0xf]
    %v141 = vld [vmem:[#allocation7 + $0x20] sm:$0xf]
    %v142 = vld [vmem:[#allocation7 + $0x24] sm:$0xf]
    %v143 = vld [vmem:[#allocation7 + $0x28] sm:$0xf]
    %v144 = vld [vmem:[#allocation7 + $0x2c] sm:$0xf]
    %v145 = vld [vmem:[#allocation7 + $0x30] sm:$0xf]
    %v146 = vld [vmem:[#allocation7 + $0x34] sm:$0xf]
    %v147 = vld [vmem:[#allocation7 + $0x38] sm:$0xf]
    %v148 = vld [vmem:[#allocation7 + $0x3c] sm:$0xf]
    %v165 = vunpack.c.l.b16 %v133
    %v166 = vunpack.c.l.b16 %v134
    %v167 = vunpack.c.l.b16 %v135
    %v168 = vunpack.c.l.b16 %v136
    %v169 = vunpack.c.l.b16 %v137
    %v170 = vunpack.c.l.b16 %v138
    %v171 = vunpack.c.l.b16 %v139
    %v172 = vunpack.c.l.b16 %v140
    %v173 = vunpack.c.l.b16 %v141
    %v174 = vunpack.c.l.b16 %v142
    %v175 = vunpack.c.l.b16 %v143
    %v176 = vunpack.c.l.b16 %v144
    %v177 = vunpack.c.l.b16 %v145
    %v178 = vunpack.c.l.b16 %v146
    %v179 = vunpack.c.l.b16 %v147
    %v180 = vunpack.c.l.b16 %v148
    %v181 = vpack.c.b16 %v166, %v165
    %v182 = vpack.c.b16 %v168, %v167
    %v183 = vpack.c.b16 %v170, %v169
    %v184 = vpack.c.b16 %v172, %v171
    %v185 = vpack.c.b16 %v174, %v173
    %v186 = vpack.c.b16 %v176, %v175
    %v187 = vpack.c.b16 %v178, %v177
    %v188 = vpack.c.b16 %v180, %v179
    %197 = vmatprep.subr.bf16.mxu0 0
    %198 = vmatpush1.bf16.msra.mxu0 %v181
    %199 = vmatprep.subr.bf16.mxu0 0
    %200 = vmatpush1.bf16.msra.mxu0 %v182
    %201 = vmatprep.subr.bf16.mxu0 0
    %202 = vmatpush1.bf16.msra.mxu0 %v183
    %203 = vmatprep.subr.bf16.mxu0 0
    %204 = vmatpush1.bf16.msra.mxu0 %v184
    %205 = vmatprep.subr.bf16.mxu0 0
    %206 = vmatpush1.bf16.msra.mxu0 %v185
    %207 = vmatprep.subr.bf16.mxu0 0
    %208 = vmatpush1.bf16.msra.mxu0 %v186
    %209 = vmatprep.subr.bf16.mxu0 0
    %210 = vmatpush1.bf16.msra.mxu0 %v187
    %211 = vmatprep.subr.bf16.mxu0 0
    %212 = vmatpush1.bf16.msra.mxu0 %v188
    %213 = vmatprep.subr.bf16.mxu0 0
    %214 = vmatpush1.bf16.msra.mxu0 0
    %215 = vmatprep.subr.bf16.mxu0 0
    %216 = vmatpush1.bf16.msra.mxu0 0
    %217 = vmatprep.subr.bf16.mxu0 0
    %218 = vmatpush1.bf16.msra.mxu0 0
    %219 = vmatprep.subr.bf16.mxu0 0
    %220 = vmatpush1.bf16.msra.mxu0 0
    %221 = vmatprep.subr.bf16.mxu0 0
    %222 = vmatpush1.bf16.msra.mxu0 0
    %223 = vmatprep.subr.bf16.mxu0 0
    %224 = vmatpush1.bf16.msra.mxu0 0
    %225 = vmatprep.subr.bf16.mxu0 0
    %226 = vmatpush1.bf16.msra.mxu0 0
    %227 = vmatprep.subr.bf16.mxu0 0
    %228 = vmatpush1.bf16.msra.mxu0 0
    %229 = vmatprep.mubr.bf16.mxu0 0
    %230 = vmatmul.mubr.bf16.gmra.mrb[0].mxu0 %v132
    %v231 = vpop.f32.mrb[0].mxu0
    %v232 = vadd.f32 0.0, %v231
    %v233 = vpop.f32.mrb[0].mxu0
    %v234 = vpop.f32.mrb[0].mxu0
    %v235 = vadd.f32 0.0, %v234
    %v236 = vpop.f32.mrb[0].mxu0
    %237 = vdwg.mxu0
    %v238 = vpack.c.bf16 %v235, %v232
    %v239 = vld [vmem:[%s4] sm:$0x1]
    %v241 = vlaneseq
    %v242 = vshrl.u32 %v241, 7
    %v243 = vsub.s32 0, %v242
    %v244 = vrot.slane %v239, %v243
    %246 = vmatprep.subr.bf16.mxu0 0
    %247 = vmatpush1.bf16.msra.mxu0 %v238
    %248 = vmatprep.subr.bf16.mxu0 0
    %249 = vmatpush1.bf16.msra.mxu0 0
    %250 = vmatprep.subr.bf16.mxu0 0
    %251 = vmatpush1.bf16.msra.mxu0 0
    %252 = vmatprep.subr.bf16.mxu0 0
    %253 = vmatpush1.bf16.msra.mxu0 0
    %254 = vmatprep.subr.bf16.mxu0 0
    %255 = vmatpush1.bf16.msra.mxu0 0
    %256 = vmatprep.subr.bf16.mxu0 0
    %257 = vmatpush1.bf16.msra.mxu0 0
    %258 = vmatprep.subr.bf16.mxu0 0
    %259 = vmatpush1.bf16.msra.mxu0 0
    %260 = vmatprep.subr.bf16.mxu0 0
    %261 = vmatpush1.bf16.msra.mxu0 0
    %262 = vmatprep.subr.bf16.mxu0 0
    %263 = vmatpush1.bf16.msra.mxu0 0
    %264 = vmatprep.subr.bf16.mxu0 0
    %265 = vmatpush1.bf16.msra.mxu0 0
    %266 = vmatprep.subr.bf16.mxu0 0
    %267 = vmatpush1.bf16.msra.mxu0 0
    %268 = vmatprep.subr.bf16.mxu0 0
    %269 = vmatpush1.bf16.msra.mxu0 0
    %270 = vmatprep.subr.bf16.mxu0 0
    %271 = vmatpush1.bf16.msra.mxu0 0
    %272 = vmatprep.subr.bf16.mxu0 0
    %273 = vmatpush1.bf16.msra.mxu0 0
    %274 = vmatprep.subr.bf16.mxu0 0
    %275 = vmatpush1.bf16.msra.mxu0 0
    %276 = vmatprep.subr.bf16.mxu0 0
    %277 = vmatpush1.bf16.msra.mxu0 0
    %278 = vmatprep.mubr.bf16.mxu0 0
    %279 = vmatmul.mubr.bf16.gmra.mrb[0].mxu0 %v87
    %v280 = vpop.f32.mrb[0].mxu0
    %v281 = vadd.f32 %v244, %v280
    %v282 = vpop.f32.mrb[0].mxu0
    %v283 = vpop.f32.mrb[0].mxu0
    %v284 = vadd.f32 %v244, %v283
    %v285 = vpop.f32.mrb[0].mxu0
    %286 = vdwg.mxu0
    %287 = vst [vmem:[#allocation8] sm:$0xff] %v281
    %288 = vst [vmem:[#allocation8 + $0x8] sm:$0xff] %v284
    // Predicated region
    $region34: #{tpu_custom_call.1} parent=1 // pred_check
      _
    $region35: #{tpu_custom_call.1} parent=1 // pred_check_branch
      %290 = sbr.rel (0) target = $region37
    $region36: #{tpu_custom_call.1} parent=1 // pred_region
      %s292 = ssub.s32 256, 256
      %293 = vsyncadd [#allocation4], %s292
      %s294 = sshll.u32 [#allocation8], 4
      %s295 = int_to_ptr.vmem [resolvable:$true] %s294
      %300 = dma.vmem_to_hbm [thread:$0]  %s295, 256, %s5, [#allocation4], 128, 128, 8
    $region37: #{tpu_custom_call.1} parent=1 // pred_fallthru
      _
    // Predicated region
    $region38: #{tpu_custom_call.1} parent=1 // pred_check
      _
    $region39: #{tpu_custom_call.1} parent=1 // pred_check_branch
      %302 = sbr.rel (0) target = $region41
    $region40: #{tpu_custom_call.1} parent=1 // pred_region
      %303 = dma.done [#allocation4], 256
    $region41: #{tpu_custom_call.1} parent=1 // pred_fallthru
      _
    %304 = vsyncpa [#allocation3], 1
    %305 = vsyncpa [#allocation6], 1
    %306 = vsyncpa [#allocation4], 1

</llo_original>
